<compile_context>
chip_gen: v6e
topology: v6e:2x2x1
jax: 0.10.0
libtpu: 0.0.40
codegen_flags: <defaults>
</compile_context>

<pallas_src>
import jax
import jax.numpy as jnp
import numpy as np
from jax.experimental import pallas as pl
from jax.experimental.pallas import tpu as pltpu

# ---- small, lane-dense configuration ----------------------------------------
IN_DIM1 = 128      # per-step width of x['inters']
IN_DIM2 = 128      # width of x['rels']
OUT_DIM = 128      # fc_out output width (lane-dense output store)
BATCH = 16         # >= 2 grid steps so v7x's second TensorCore participates
SEQ = 4            # x['inters'] is [B, SEQ, IN_DIM1]

# TODO(synk): nn.Dropout(p=opt.dropout) is stochastic in train mode; we
# implement eval-mode (identity) dropout, matching PyTorch inference semantics.


def _choose_tile_b(batch):
    """Batch-tile size: aim for >=2 grid steps (v7x megacore) while keeping
    tiles large (up to 512 rows) to amortize per-grid-step overhead."""
    half = pl.cdiv(batch, 2)
    tile = ((half + 7) // 8) * 8          # round up to a sublane multiple
    return int(min(max(tile, 8), 512))


def gating_kernel(xr_ref, xi0_ref, w_ref, b_ref, out_ref):
    # Build the concat operand as two 128-lane tiles side by side (layout only),
    # then ONE K=256 MXU matmul with f32 accumulation.
    xr = xr_ref[...]                                   # [TB, IN_DIM2] bf16 (pre-cast)
    xi0 = xi0_ref[...].astype(jnp.bfloat16)            # [TB, IN_DIM1]
    lhs = jnp.concatenate([xr, xi0], axis=-1)          # [TB, IN_DIM2+IN_DIM1]
    acc = jnp.dot(lhs, w_ref[...], preferred_element_type=jnp.float32)
    # relu (+ identity dropout); bias broadcast is a tiny sublane-broadcast.
    out_ref[...] = jnp.maximum(acc + b_ref[...], 0.0)


def gating_forward(x, params):
    """x: {'inters': [B, S, IN_DIM1], 'rels': [B, IN_DIM2]} -> [B, OUT_DIM]."""
    xi, xr = x["inters"], x["rels"]
    batch = xr.shape[0]
    # torch's `xi.view(batch, -1, in_dim1)` is a free row-major reshape; the
    # `[:, 0, :]` selection happens inside the BlockSpec (first IN_DIM1 lanes,
    # strided DMA). Keep xi f32 in HBM -- see header note.
    xi_flat = xi.reshape(batch, -1)                    # [B, S*IN_DIM1] f32
    xr_bf16 = xr.astype(jnp.bfloat16)                  # [B, IN_DIM2]   bf16
    w_bf16 = params["w"].astype(jnp.bfloat16)          # packed (IN_DIM2+IN_DIM1, OUT_DIM)
    b = params["b"]                                    # (1, OUT_DIM) f32

    tile_b = _choose_tile_b(batch)
    grid = (pl.cdiv(batch, tile_b),)
    return pl.pallas_call(
        gating_kernel,
        out_shape=jax.ShapeDtypeStruct((batch, OUT_DIM), jnp.float32),
        grid=grid,
        in_specs=[
            pl.BlockSpec((tile_b, IN_DIM2), lambda i: (i, 0)),             # xr  (bf16)
            pl.BlockSpec((tile_b, IN_DIM1), lambda i: (i, 0)),             # xi seq-0 cols (f32, strided)
            pl.BlockSpec((IN_DIM2 + IN_DIM1, OUT_DIM), lambda i: (0, 0)),  # packed W (bf16)
            pl.BlockSpec((1, OUT_DIM), lambda i: (0, 0)),                  # bias (f32)
        ],
        out_specs=pl.BlockSpec((tile_b, OUT_DIM), lambda i: (i, 0)),
        compiler_params=pltpu.CompilerParams(dimension_semantics=("parallel",)),
    )(xr_bf16, xi_flat, w_bf16, b)


def _make_params(key):
    """fc_out weight stored pre-transposed as (in_features, out_dim); rows
    [0:IN_DIM2) multiply xr, rows [IN_DIM2:) multiply xi0 (matches torch cat order)."""
    kw, kb = jax.random.split(key)
    w = jax.random.normal(kw, (IN_DIM2 + IN_DIM1, OUT_DIM), jnp.float32) * 0.05
    b = jax.random.normal(kb, (1, OUT_DIM), jnp.float32) * 0.05
    return {"w": w, "b": b}


def _reference(x, params):
    """Pure-JAX (f32) reference of the PyTorch forward in eval mode."""
    xi, xr = x["inters"], x["rels"]
    batch = xr.shape[0]
    xi0 = xi.reshape(batch, -1, IN_DIM1)[:, 0, :]
    tmp = jnp.concatenate([xr, xi0], axis=-1)
    return jax.nn.relu(tmp @ params["w"] + params["b"])


if __name__ == "__main__":
    root = jax.random.PRNGKey(0)
    k_xi, k_xr, k_par = jax.random.split(root, 3)
    x = {
        "inters": jax.random.normal(k_xi, (BATCH, SEQ, IN_DIM1), jnp.float32),
        "rels": jax.random.normal(k_xr, (BATCH, IN_DIM2), jnp.float32),
    }
    params = _make_params(k_par)

    out = gating_forward(x, params)
    out = jax.block_until_ready(out)

    ref = _reference(x, params)
    # bf16 MXU operands (f32 accumulate) -> loosened tolerance vs the f32 reference.
    np.testing.assert_allclose(np.asarray(out), np.asarray(ref), rtol=2e-2, atol=2e-2)
    print("KERNEL_OK")
</pallas_src>

<mosaic_0001>
module attributes {stable_mosaic.version = 11 : i64} {
  func.func @gating_kernel(%arg0: i32, %arg1: memref<8x128xbf16, #tpu.memory_space<vmem>>, %arg2: memref<8x128xf32, #tpu.memory_space<vmem>>, %arg3: memref<256x128xbf16, #tpu.memory_space<vmem>>, %arg4: memref<1x128xf32, #tpu.memory_space<vmem>>, %arg5: memref<8x128xf32, #tpu.memory_space<vmem>>) attributes {dimension_semantics = [#tpu.dimension_semantics<parallel>], iteration_bounds = array<i64: 2>, scalar_prefetch = 0 : i64, scratch_operands = 0 : i64, tpu.core_type = #tpu.core_type<tc>, window_params = [{transform_indices = @transform_0, window_bounds = array<i64: 8, 128>}, {transform_indices = @transform_1, window_bounds = array<i64: 8, 128>}, {pipeline_mode = #tpu.pipeline_mode<synchronous>, transform_indices = @transform_2, window_bounds = array<i64: 256, 128>}, {pipeline_mode = #tpu.pipeline_mode<synchronous>, transform_indices = @transform_3, window_bounds = array<i64: 1, 128>}, {transform_indices = @transform_4, window_bounds = array<i64: 8, 128>}]} {
    %c0 = arith.constant 0 : index
    %c0_0 = arith.constant 0 : index
    %0 = vector.load %arg1[%c0, %c0_0] : memref<8x128xbf16, #tpu.memory_space<vmem>>, vector<8x128xbf16>
    %c0_1 = arith.constant 0 : index
    %c0_2 = arith.constant 0 : index
    %1 = vector.load %arg2[%c0_1, %c0_2] : memref<8x128xf32, #tpu.memory_space<vmem>>, vector<8x128xf32>
    %2 = arith.truncf %1 : vector<8x128xf32> to vector<8x128xbf16>
    %3 = tpu.concatenate %0, %2 in 1 : vector<8x128xbf16>, vector<8x128xbf16> -> vector<8x256xbf16>
    %c0_3 = arith.constant 0 : index
    %c0_4 = arith.constant 0 : index
    %4 = vector.load %arg3[%c0_3, %c0_4] : memref<256x128xbf16, #tpu.memory_space<vmem>>, vector<256x128xbf16>
    %cst = arith.constant dense<0.000000e+00> : vector<8x128xf32>
    %5 = tpu.matmul %3, %4, %cst {dimension_numbers = #tpu.dot_dimension_numbers<[1], [0], [0], [1], [0, 0, 1, 1], [], []>} : vector<8x256xbf16>, vector<256x128xbf16>, vector<8x128xf32> -> vector<8x128xf32>
    %c0_5 = arith.constant 0 : index
    %c0_6 = arith.constant 0 : index
    %6 = vector.load %arg4[%c0_5, %c0_6] : memref<1x128xf32, #tpu.memory_space<vmem>>, vector<1x128xf32>
    %7 = vector.broadcast %6 : vector<1x128xf32> to vector<8x128xf32>
    %8 = arith.addf %5, %7 : vector<8x128xf32>
    %cst_7 = arith.constant 0.000000e+00 : f32
    %9 = vector.broadcast %cst_7 : f32 to vector<8x128xf32>
    %10 = arith.maximumf %8, %9 : vector<8x128xf32>
    %c0_8 = arith.constant 0 : index
    %c0_9 = arith.constant 0 : index
    %11 = vector.load %arg5[%c0_8, %c0_9] : memref<8x128xf32, #tpu.memory_space<vmem>>, vector<8x128xf32>
    tpu.vector_store %arg5[%c0_8, %c0_9], %10 {strides = array<i32>} : memref<8x128xf32, #tpu.memory_space<vmem>>, vector<8x128xf32>,
    return
  }
  func.func @transform_0(%arg0: i32) -> (i32, i32) {
    %c0_i32 = arith.constant 0 : i32
    %c0_i32_0 = arith.constant 0 : i32
    return %arg0, %c0_i32 : i32, i32
  }
  func.func @transform_1(%arg0: i32) -> (i32, i32) {
    %c0_i32 = arith.constant 0 : i32
    %c0_i32_0 = arith.constant 0 : i32
    return %arg0, %c0_i32 : i32, i32
  }
  func.func @transform_2(%arg0: i32) -> (i32, i32) {
    %c0_i32 = arith.constant 0 : i32
    %c0_i32_0 = arith.constant 0 : i32
    %c0_i32_1 = arith.constant 0 : i32
    return %c0_i32, %c0_i32_0 : i32, i32
  }
  func.func @transform_3(%arg0: i32) -> (i32, i32) {
    %c0_i32 = arith.constant 0 : i32
    %c0_i32_0 = arith.constant 0 : i32
    %c0_i32_1 = arith.constant 0 : i32
    return %c0_i32, %c0_i32_0 : i32, i32
  }
  func.func @transform_4(%arg0: i32) -> (i32, i32) {
    %c0_i32 = arith.constant 0 : i32
    %c0_i32_0 = arith.constant 0 : i32
    return %arg0, %c0_i32 : i32, i32
  }
}

</mosaic_0001>

<llo_original>
// kernel: tpu_custom_call.1
$region0: #{tpu_custom_call.1}
  #allocation0 [shape = 'u32[]', space=smem, size = 0x4, offset = 0x4, fixed_abs, tag = 'smem constant byte address 0x4 - core index']
  #allocation1 [shape = 'u32[144,128]{1,0:T(1,128)}', space=vmem, size = 0x12000, scoped, tag = 'internal scratch']
  %s0 = inlined_call_operand.hbm [shape: bf16[16,128], index: 0, kind: input, shape index: {}]
  %s1 = inlined_call_operand.hbm [shape: f32[16,512], index: 1, kind: input, shape index: {}]
  %s2 = inlined_call_operand.hbm [shape: bf16[256,128], index: 2, kind: input, shape index: {}]
  %s3 = inlined_call_operand.vmem [shape: f32[1,128], index: 3, kind: input, shape index: {}]
  %s4 = inlined_call_operand.hbm [shape: f32[16,128], index: 4, kind: output, shape index: {}]
  %s5 = sld [smem:[#allocation0]]
  $region61: #{tpu_custom_call.1} parent=0
    _
  %s7 = ssub.s32 1, %s5
  %s8 = scalar_select 0, %s7, %s5
  $region1: #{tpu_custom_call.1} parent=0
    #allocation2 [shape = 'u8[4096]{0}', space=vmem, size = 0x1000, scoped, tag = 'input window, operand 0']
    #allocation3 [shape = 's32[2]{0}', space=sflag, size = 0x8, scoped, tag = 'scoped memory for tpu_custom_call.1']
    #allocation4 [shape = 's32[2]{0}', space=sflag, size = 0x8, scoped, tag = 'scoped memory for tpu_custom_call.1']
    #allocation5 [shape = 'u8[8192]{0}', space=vmem, size = 0x2000, scoped, tag = 'input window, operand 1']
    #allocation6 [shape = 's32[2]{0}', space=sflag, size = 0x8, scoped, tag = 'scoped memory for tpu_custom_call.1']
    #allocation7 [shape = 'u8[65536]{0}', space=vmem, size = 0x10000, scoped, tag = 'input window, operand 2, single buffered']
    #allocation8 [shape = 'u8[8192]{0}', space=vmem, size = 0x2000, scoped, tag = 'output window, operand 0']
    %9 = vsyncpa [#allocation3], 0
    %s10 = scalar_lea.sflag [#allocation3], 1
    %11 = vsyncpa %s10, 0
    %12 = vsyncpa [#allocation6], 0
    %s13 = scalar_lea.sflag [#allocation6], 1
    %14 = vsyncpa %s13, 0
    %15 = vsyncpa [#allocation4], 0
    %s16 = scalar_lea.sflag [#allocation4], 1
    %17 = vsyncpa %s16, 0
    loop: start=0, step=1, limit=4
    $region2: #{tpu_custom_call.1} parent=1 // loop_pre_header
      _
    $region3: #{tpu_custom_call.1} parent=1 // loop_header
      %s19 = sphi 0, %s23
      %p20 = scmp.ge.s32.totalorder %s19, 4
      %s29 = sphi 0, %s31
      %s32 = sphi 0, %s29
      %s33 = sphi 0, %s32
      %s49 = sphi 0, %s33
      %s55 = sphi 0, %s57
      %s58 = sphi 0, %s55
      %s59 = sphi 0, %s58
      %s75 = sphi 0, %s59
      %s79 = sphi 0, %s79
      %s81 = sphi 0, %s79
      %s82 = sphi 0, %s81
      %s96 = sphi 0, %s82
      %s100 = sphi 0, %s100
      %s102 = sphi 0, %s100
      %s103 = sphi 0, %s102
      %s117 = sphi 0, %s103
      %s123 = sphi 0, %s125
      %s126 = sphi 0, %s123
      %s127 = sphi 0, %s126
      %s143 = sphi 0, %s127
    $region4: #{tpu_custom_call.1} parent=1 // loop_header_branch
      %22 = sbr.rel (%p20) target = $region8
    $region5: #{tpu_custom_call.1} parent=1 // loop_body
      %s24 = ssub.s32 %s19, 1
      %s25 = ssub.s32 %s19, 2
      %s26 = sadd.s32 %s19, 1
      %s27 = ssub.s32 %s19, %s26
      %p28 = scmp.eq.s32.totalorder %s27, 0
      %s30 = sadd.s32 %s29, 1
      %s31 = scalar_select %p28, %s29, %s30
      %p34 = pneg %p28
      %p35 = scmp.eq.s32.totalorder %s19, 1
      %p36 = por %p34, %p35
      %p37 = scmp.ne.s32.totalorder %s29, %s32
      %p38 = scmp.eq.s32.totalorder %s19, 0
      %p39 = por %p37, %p38
      %p40 = scmp.ne.s32.totalorder %s29, %s32
      %p41 = scmp.eq.s32.totalorder %s24, 1
      %p42 = por %p40, %p41
      %p43 = scmp.ne.s32.totalorder %s32, %s33
      %p44 = scmp.eq.s32.totalorder %s24, 0
      %p45 = por %p43, %p44
      %p46 = scmp.ne.s32.totalorder %s32, %s33
      %p47 = scmp.eq.s32.totalorder %s25, 1
      %p48 = por %p46, %p47
      %p50 = scmp.ne.s32.totalorder %s33, %s49
      %p51 = scmp.eq.s32.totalorder %s25, 0
      %p52 = por %p50, %p51
      %s53 = ssub.s32 %s19, %s26
      %p54 = scmp.eq.s32.totalorder %s53, 0
      %s56 = sadd.s32 %s55, 1
      %s57 = scalar_select %p54, %s55, %s56
      %p60 = pneg %p54
      %p61 = scmp.eq.s32.totalorder %s19, 1
      %p62 = por %p60, %p61
      %p63 = scmp.ne.s32.totalorder %s55, %s58
      %p64 = scmp.eq.s32.totalorder %s19, 0
      %p65 = por %p63, %p64
      %p66 = scmp.ne.s32.totalorder %s55, %s58
      %p67 = scmp.eq.s32.totalorder %s24, 1
      %p68 = por %p66, %p67
      %p69 = scmp.ne.s32.totalorder %s58, %s59
      %p70 = scmp.eq.s32.totalorder %s24, 0
      %p71 = por %p69, %p70
      %p72 = scmp.ne.s32.totalorder %s58, %s59
      %p73 = scmp.eq.s32.totalorder %s25, 1
      %p74 = por %p72, %p73
      %p76 = scmp.ne.s32.totalorder %s59, %s75
      %p77 = scmp.eq.s32.totalorder %s25, 0
      %p78 = por %p76, %p77
      %s80 = sadd.s32 %s79, 1
      %p83 = scmp.eq.s32.totalorder %s19, 1
      %p84 = scmp.ne.s32.totalorder %s79, %s81
      %p85 = scmp.eq.s32.totalorder %s19, 0
      %p86 = por %p84, %p85
      %p87 = scmp.ne.s32.totalorder %s79, %s81
      %p88 = scmp.eq.s32.totalorder %s24, 1
      %p89 = por %p87, %p88
      %p90 = scmp.ne.s32.totalorder %s81, %s82
      %p91 = scmp.eq.s32.totalorder %s24, 0
      %p92 = por %p90, %p91
      %p93 = scmp.ne.s32.totalorder %s81, %s82
      %p94 = scmp.eq.s32.totalorder %s25, 1
      %p95 = por %p93, %p94
      %p97 = scmp.ne.s32.totalorder %s82, %s96
      %p98 = scmp.eq.s32.totalorder %s25, 0
      %p99 = por %p97, %p98
      %s101 = sadd.s32 %s100, 1
      %p104 = scmp.eq.s32.totalorder %s19, 1
      %p105 = scmp.ne.s32.totalorder %s100, %s102
      %p106 = scmp.eq.s32.totalorder %s19, 0
      %p107 = por %p105, %p106
      %p108 = scmp.ne.s32.totalorder %s100, %s102
      %p109 = scmp.eq.s32.totalorder %s24, 1
      %p110 = por %p108, %p109
      %p111 = scmp.ne.s32.totalorder %s102, %s103
      %p112 = scmp.eq.s32.totalorder %s24, 0
      %p113 = por %p111, %p112
      %p114 = scmp.ne.s32.totalorder %s102, %s103
      %p115 = scmp.eq.s32.totalorder %s25, 1
      %p116 = por %p114, %p115
      %p118 = scmp.ne.s32.totalorder %s103, %s117
      %p119 = scmp.eq.s32.totalorder %s25, 0
      %p120 = por %p118, %p119
      %s121 = ssub.s32 %s19, %s26
      %p122 = scmp.eq.s32.totalorder %s121, 0
      %s124 = sadd.s32 %s123, 1
      %s125 = scalar_select %p122, %s123, %s124
      %p128 = pneg %p122
      %p129 = scmp.eq.s32.totalorder %s19, 1
      %p130 = por %p128, %p129
      %p131 = scmp.ne.s32.totalorder %s123, %s126
      %p132 = scmp.eq.s32.totalorder %s19, 0
      %p133 = por %p131, %p132
      %p134 = scmp.ne.s32.totalorder %s123, %s126
      %p135 = scmp.eq.s32.totalorder %s24, 1
      %p136 = por %p134, %p135
      %p137 = scmp.ne.s32.totalorder %s126, %s127
      %p138 = scmp.eq.s32.totalorder %s24, 0
      %p139 = por %p137, %p138
      %p140 = scmp.ne.s32.totalorder %s126, %s127
      %p141 = scmp.eq.s32.totalorder %s25, 1
      %p142 = por %p140, %p141
      %p144 = scmp.ne.s32.totalorder %s127, %s143
      %p145 = scmp.eq.s32.totalorder %s25, 0
      %p146 = por %p144, %p145
      %p147 = scmp.le.s32.totalorder 1, %s19
      %p148 = scmp.lt.s32.totalorder %s19, 3
      %p149 = pnand %p147, %p148
      %p150 = pneg %p149
      // Predicated region
      $region9: #{tpu_custom_call.1} parent=5 // pred_check
        _
      $region10: #{tpu_custom_call.1} parent=5 // pred_check_branch
        %152 = sbr.rel (%p149) target = $region12
      $region11: #{tpu_custom_call.1} parent=5 // pred_region
        %s153 = ssub.s32 %s19, 1
        // Predicated region
        $region13: #{tpu_custom_call.1} parent=11 // pred_check
          %p154 = pneg %p92
        $region14: #{tpu_custom_call.1} parent=11 // pred_check_branch
          %156 = sbr.rel (%p154) target = $region16
        $region15: #{tpu_custom_call.1} parent=11 // pred_region
          %s158 = ssub.s32 2048, 2048
          %159 = vsyncadd [#allocation6], %s158
          %s160 = sshll.u32 [#allocation7], 4
          %s161 = int_to_ptr.vmem [resolvable:$true] %s160
          %166 = dma.hbm_to_vmem [thread:$0]  %s2, 2048, %s161, [#allocation6], 64, 64, 4
        $region16: #{tpu_custom_call.1} parent=11 // pred_fallthru
          _
        // Predicated region
        $region17: #{tpu_custom_call.1} parent=11 // pred_check
          %p167 = pneg %p113
        $region18: #{tpu_custom_call.1} parent=11 // pred_check_branch
          %169 = sbr.rel (%p167) target = $region20
        $region19: #{tpu_custom_call.1} parent=11 // pred_region
          _
        $region20: #{tpu_custom_call.1} parent=11 // pred_fallthru
          _
      $region12: #{tpu_custom_call.1} parent=5 // pred_fallthru
        _
      %p170 = scmp.lt.s32.totalorder %s19, 2
      // Predicated region
      $region21: #{tpu_custom_call.1} parent=5 // pred_check
        %p171 = pneg %p170
      $region22: #{tpu_custom_call.1} parent=5 // pred_check_branch
        %173 = sbr.rel (%p171) target = $region24
      $region23: #{tpu_custom_call.1} parent=5 // pred_region
        // Predicated region
        $region25: #{tpu_custom_call.1} parent=23 // pred_check
          %p174 = pneg %p39
        $region26: #{tpu_custom_call.1} parent=23 // pred_check_branch
          %176 = sbr.rel (%p174) target = $region28
        $region27: #{tpu_custom_call.1} parent=23 // pred_region
          %s177 = sand.u32 %s29, 1
          %s178 = scalar_lea.sflag [#allocation3], %s177
          %s179 = sand.u32 %s29, 1
          %s180 = smul.addr %s179, 4
          %s181 = scalar_lea.vmem [#allocation2], %s180
          %s183 = ssub.s32 64, 64
          %184 = vsyncadd %s178, %s183
          %s185 = smul.addr %s19, 64
          %s186 = scalar_lea.hbm %s0, %s185
          %s188 = sshll.u32 %s181, 4
          %s189 = int_to_ptr.vmem [resolvable:$true] %s188
          %191 = dma.hbm_to_vmem [thread:$0]  %s186, 64, %s189, %s178
        $region28: #{tpu_custom_call.1} parent=23 // pred_fallthru
          _
        // Predicated region
        $region29: #{tpu_custom_call.1} parent=23 // pred_check
          %p192 = pneg %p65
        $region30: #{tpu_custom_call.1} parent=23 // pred_check_branch
          %194 = sbr.rel (%p192) target = $region32
        $region31: #{tpu_custom_call.1} parent=23 // pred_region
          %s195 = sand.u32 %s19, 1
          %s196 = scalar_lea.sflag [#allocation6], %s195
          %s197 = sand.u32 %s55, 1
          %s198 = smul.addr %s197, 8
          %s199 = scalar_lea.vmem [#allocation5], %s198
          %s201 = ssub.s32 128, 128
          %202 = vsyncadd %s196, %s201
          %s203 = smul.addr %s19, 4
          %s204 = smul.addr %s203, 128
          %s205 = scalar_lea.hbm %s1, %s204
          %s207 = sshll.u32 %s199, 4
          %s208 = int_to_ptr.vmem [resolvable:$true] %s207
          %210 = dma.hbm_to_vmem [thread:$0]  %s205, 128, %s208, %s196
        $region32: #{tpu_custom_call.1} parent=23 // pred_fallthru
          _
      $region24: #{tpu_custom_call.1} parent=5 // pred_fallthru
        _
      %p211 = scmp.le.s32.totalorder 1, %s19
      %p212 = scmp.lt.s32.totalorder %s19, 3
      %p213 = pnand %p211, %p212
      %p214 = pneg %p213
      // Predicated region
      $region33: #{tpu_custom_call.1} parent=5 // pred_check
        _
      $region34: #{tpu_custom_call.1} parent=5 // pred_check_branch
        %216 = sbr.rel (%p213) target = $region36
      $region35: #{tpu_custom_call.1} parent=5 // pred_region
        %s217 = ssub.s32 %s19, 1
        %s218 = sand.u32 %s32, 1
        %s219 = scalar_lea.sflag [#allocation3], %s218
        %s220 = sand.u32 %s32, 1
        %s221 = smul.addr %s220, 4
        %s222 = scalar_lea.vmem [#allocation2], %s221
        // Predicated region
        $region37: #{tpu_custom_call.1} parent=35 // pred_check
          %p223 = pneg %p45
        $region38: #{tpu_custom_call.1} parent=35 // pred_check_branch
          %225 = sbr.rel (%p223) target = $region40
        $region39: #{tpu_custom_call.1} parent=35 // pred_region
          %226 = dma.done %s219, 64
        $region40: #{tpu_custom_call.1} parent=35 // pred_fallthru
          _
        %s227 = sand.u32 %s24, 1
        %s228 = scalar_lea.sflag [#allocation6], %s227
        %s229 = sand.u32 %s58, 1
        %s230 = smul.addr %s229, 8
        %s231 = scalar_lea.vmem [#allocation5], %s230
        // Predicated region
        $region41: #{tpu_custom_call.1} parent=35 // pred_check
          %p232 = pneg %p71
        $region42: #{tpu_custom_call.1} parent=35 // pred_check_branch
          %234 = sbr.rel (%p232) target = $region44
        $region43: #{tpu_custom_call.1} parent=35 // pred_region
          %235 = dma.done %s228, 128
        $region44: #{tpu_custom_call.1} parent=35 // pred_fallthru
          _
        // Predicated region
        $region45: #{tpu_custom_call.1} parent=35 // pred_check
          %p236 = pneg %p92
        $region46: #{tpu_custom_call.1} parent=35 // pred_check_branch
          %238 = sbr.rel (%p236) target = $region48
        $region47: #{tpu_custom_call.1} parent=35 // pred_region
          %239 = dma.done [#allocation6], 2048
        $region48: #{tpu_custom_call.1} parent=35 // pred_fallthru
          _
        %s240 = sand.u32 %s32, 1
        %s241 = scalar_lea.sflag [#allocation3], %s240
        %s242 = sand.u32 %s32, 1
        %s243 = smul.addr %s242, 4
        %s244 = scalar_lea.vmem [#allocation2], %s243
        %p245 = pneg %p45
        %p246 = pneg %p42
        %s247 = sand.u32 %s24, 1
        %s248 = scalar_lea.sflag [#allocation6], %s247
        %s249 = sand.u32 %s58, 1
        %s250 = smul.addr %s249, 8
        %s251 = scalar_lea.vmem [#allocation5], %s250
        %p252 = pneg %p71
        %p253 = pneg %p68
        %p254 = pneg %p92
        %p255 = pneg %p89
        %p256 = pneg %p113
        %p257 = pneg %p110
        %p258 = pneg %p139
        %p259 = pneg %p136
        %s260 = sand.u32 %s126, 1
        %s261 = scalar_lea.sflag [#allocation4], %s260
        %s262 = sand.u32 %s126, 1
        %s263 = smul.addr %s262, 8
        %s264 = scalar_lea.vmem [#allocation8], %s263
        %v266 = vld [vmem:[%s222] sm:$0xf]
        %v267 = vld [vmem:[%s231] sm:$0xff]
        %v268 = vpack.c.bf16 %v267, %v267
        %v269 = vld [vmem:[#allocation7] sm:$0xf]
        %v270 = vld [vmem:[#allocation7 + $0x4] sm:$0xf]
        %v271 = vld [vmem:[#allocation7 + $0x8] sm:$0xf]
        %v272 = vld [vmem:[#allocation7 + $0xc] sm:$0xf]
        %v273 = vld [vmem:[#allocation7 + $0x10] sm:$0xf]
        %v274 = vld [vmem:[#allocation7 + $0x14] sm:$0xf]
        %v275 = vld [vmem:[#allocation7 + $0x18] sm:$0xf]
        %v276 = vld [vmem:[#allocation7 + $0x1c] sm:$0xf]
        %v277 = vld [vmem:[#allocation7 + $0x20] sm:$0xf]
        %v278 = vld [vmem:[#allocation7 + $0x24] sm:$0xf]
        %v279 = vld [vmem:[#allocation7 + $0x28] sm:$0xf]
        %v280 = vld [vmem:[#allocation7 + $0x2c] sm:$0xf]
        %v281 = vld [vmem:[#allocation7 + $0x30] sm:$0xf]
        %v282 = vld [vmem:[#allocation7 + $0x34] sm:$0xf]
        %v283 = vld [vmem:[#allocation7 + $0x38] sm:$0xf]
        %v284 = vld [vmem:[#allocation7 + $0x3c] sm:$0xf]
        %v285 = vld [vmem:[#allocation7 + $0x40] sm:$0xf]
        %v286 = vld [vmem:[#allocation7 + $0x44] sm:$0xf]
        %v287 = vld [vmem:[#allocation7 + $0x48] sm:$0xf]
        %v288 = vld [vmem:[#allocation7 + $0x4c] sm:$0xf]
        %v289 = vld [vmem:[#allocation7 + $0x50] sm:$0xf]
        %v290 = vld [vmem:[#allocation7 + $0x54] sm:$0xf]
        %v291 = vld [vmem:[#allocation7 + $0x58] sm:$0xf]
        %v292 = vld [vmem:[#allocation7 + $0x5c] sm:$0xf]
        %v293 = vld [vmem:[#allocation7 + $0x60] sm:$0xf]
        %v294 = vld [vmem:[#allocation7 + $0x64] sm:$0xf]
        %v295 = vld [vmem:[#allocation7 + $0x68] sm:$0xf]
        %v296 = vld [vmem:[#allocation7 + $0x6c] sm:$0xf]
        %v297 = vld [vmem:[#allocation7 + $0x70] sm:$0xf]
        %v298 = vld [vmem:[#allocation7 + $0x74] sm:$0xf]
        %v299 = vld [vmem:[#allocation7 + $0x78] sm:$0xf]
        %v300 = vld [vmem:[#allocation7 + $0x7c] sm:$0xf]
        %v301 = vld [vmem:[%s3] sm:$0x1]
        %v303 = vlaneseq
        %v304 = vshrl.u32 %v303, 7
        %v305 = vsub.s32 0, %v304
        %v306 = vrot.slane %v301, %v305
        %v340 = vunpack.c.l.b16 %v269
        %v341 = vunpack.c.l.b16 %v270
        %v342 = vunpack.c.l.b16 %v271
        %v343 = vunpack.c.l.b16 %v272
        %v344 = vunpack.c.l.b16 %v273
        %v345 = vunpack.c.l.b16 %v274
        %v346 = vunpack.c.l.b16 %v275
        %v347 = vunpack.c.l.b16 %v276
        %v348 = vunpack.c.l.b16 %v277
        %v349 = vunpack.c.l.b16 %v278
        %v350 = vunpack.c.l.b16 %v279
        %v351 = vunpack.c.l.b16 %v280
        %v352 = vunpack.c.l.b16 %v281
        %v353 = vunpack.c.l.b16 %v282
        %v354 = vunpack.c.l.b16 %v283
        %v355 = vunpack.c.l.b16 %v284
        %v356 = vunpack.c.l.b16 %v285
        %v357 = vunpack.c.l.b16 %v286
        %v358 = vunpack.c.l.b16 %v287
        %v359 = vunpack.c.l.b16 %v288
        %v360 = vunpack.c.l.b16 %v289
        %v361 = vunpack.c.l.b16 %v290
        %v362 = vunpack.c.l.b16 %v291
        %v363 = vunpack.c.l.b16 %v292
        %v364 = vunpack.c.l.b16 %v293
        %v365 = vunpack.c.l.b16 %v294
        %v366 = vunpack.c.l.b16 %v295
        %v367 = vunpack.c.l.b16 %v296
        %v368 = vunpack.c.l.b16 %v297
        %v369 = vunpack.c.l.b16 %v298
        %v370 = vunpack.c.l.b16 %v299
        %v371 = vunpack.c.l.b16 %v300
        %v372 = vpack.c.b16 %v341, %v340
        %v373 = vpack.c.b16 %v343, %v342
        %v374 = vpack.c.b16 %v345, %v344
        %v375 = vpack.c.b16 %v347, %v346
        %v376 = vpack.c.b16 %v349, %v348
        %v377 = vpack.c.b16 %v351, %v350
        %v378 = vpack.c.b16 %v353, %v352
        %v379 = vpack.c.b16 %v355, %v354
        %v380 = vpack.c.b16 %v357, %v356
        %v381 = vpack.c.b16 %v359, %v358
        %v382 = vpack.c.b16 %v361, %v360
        %v383 = vpack.c.b16 %v363, %v362
        %v384 = vpack.c.b16 %v365, %v364
        %v385 = vpack.c.b16 %v367, %v366
        %v386 = vpack.c.b16 %v369, %v368
        %v387 = vpack.c.b16 %v371, %v370
        %404 = vmatprep.subr.bf16.mxu0 0
        %405 = vmatpush1.bf16.msra.mxu0 %v379
        %406 = vmatprep.subr.bf16.mxu0 0
        %407 = vmatpush1.bf16.msra.mxu0 %v378
        %408 = vmatprep.subr.bf16.mxu0 0
        %409 = vmatpush1.bf16.msra.mxu0 %v377
        %410 = vmatprep.subr.bf16.mxu0 0
        %411 = vmatpush1.bf16.msra.mxu0 %v376
        %412 = vmatprep.subr.bf16.mxu0 0
        %413 = vmatpush1.bf16.msra.mxu0 %v375
        %414 = vmatprep.subr.bf16.mxu0 0
        %415 = vmatpush1.bf16.msra.mxu0 %v374
        %416 = vmatprep.subr.bf16.mxu0 0
        %417 = vmatpush1.bf16.msra.mxu0 %v373
        %418 = vmatprep.subr.bf16.mxu0 0
        %419 = vmatpush1.bf16.msra.mxu0 %v372
        %420 = vmatprep.subr.bf16.mxu0 0
        %421 = vmatpush2.bf16.msra.mxu0 %v387
        %422 = vmatprep.subr.bf16.mxu0 0
        %423 = vmatpush2.bf16.msra.mxu0 %v386
        %424 = vmatprep.subr.bf16.mxu0 0
        %425 = vmatpush2.bf16.msra.mxu0 %v385
        %426 = vmatprep.subr.bf16.mxu0 0
        %427 = vmatpush2.bf16.msra.mxu0 %v384
        %428 = vmatprep.subr.bf16.mxu0 0
        %429 = vmatpush2.bf16.msra.mxu0 %v383
        %430 = vmatprep.subr.bf16.mxu0 0
        %431 = vmatpush2.bf16.msra.mxu0 %v382
        %432 = vmatprep.subr.bf16.mxu0 0
        %433 = vmatpush2.bf16.msra.mxu0 %v381
        %434 = vmatprep.subr.bf16.mxu0 0
        %435 = vmatpush2.bf16.msra.mxu0 %v380
        %436 = vmatprep.mubr.bf16.mxu0 %v268
        %437 = vmatmul.mubr.bf16.gmra.mxu0 %v266
        %v438 = vpop.f32.mrf.mxu0
        %v439 = vadd.f32 %v306, %v438
        %v440 = vpop.f32.mrf.mxu0
        %v441 = vpop.f32.mrf.mxu0
        %v442 = vpop.f32.mrf.mxu0
        %443 = vdwg.mxu0
        %v444 = vmax.f32 %v439, 0.0
        %445 = vst [vmem:[%s264] sm:$0xff] %v444
        %s446 = sand.u32 %s126, 1
        %s447 = scalar_lea.sflag [#allocation4], %s446
        %s448 = sand.u32 %s126, 1
        %s449 = smul.addr %s448, 8
        %s450 = scalar_lea.vmem [#allocation8], %s449
        // Predicated region
        $region49: #{tpu_custom_call.1} parent=35 // pred_check
          %p451 = pneg %p136
        $region50: #{tpu_custom_call.1} parent=35 // pred_check_branch
          %453 = sbr.rel (%p451) target = $region52
        $region51: #{tpu_custom_call.1} parent=35 // pred_region
          %s455 = ssub.s32 128, 128
          %456 = vsyncadd %s447, %s455
          %s457 = smul.addr %s24, 128
          %s458 = scalar_lea.hbm %s4, %s457
          %s460 = sshll.u32 %s450, 4
          %s461 = int_to_ptr.vmem [resolvable:$true] %s460
          %463 = dma.vmem_to_hbm [thread:$0]  %s461, 128, %s458, %s447
        $region52: #{tpu_custom_call.1} parent=35 // pred_fallthru
          _
      $region36: #{tpu_custom_call.1} parent=5 // pred_fallthru
        _
      %p464 = scmp.le.s32.totalorder 2, %s19
      // Predicated region
      $region53: #{tpu_custom_call.1} parent=5 // pred_check
        %p465 = pneg %p464
      $region54: #{tpu_custom_call.1} parent=5 // pred_check_branch
        %467 = sbr.rel (%p465) target = $region56
      $region55: #{tpu_custom_call.1} parent=5 // pred_region
        %s468 = ssub.s32 %s19, 2
        // Predicated region
        $region57: #{tpu_custom_call.1} parent=55 // pred_check
          %p469 = pneg %p142
        $region58: #{tpu_custom_call.1} parent=55 // pred_check_branch
          %471 = sbr.rel (%p469) target = $region60
        $region59: #{tpu_custom_call.1} parent=55 // pred_region
          %s472 = sand.u32 %s127, 1
          %s473 = scalar_lea.sflag [#allocation4], %s472
          %s474 = sand.u32 %s127, 1
          %s475 = smul.addr %s474, 8
          %s476 = scalar_lea.vmem [#allocation8], %s475
          %477 = dma.done %s473, 128
        $region60: #{tpu_custom_call.1} parent=55 // pred_fallthru
          _
      $region56: #{tpu_custom_call.1} parent=5 // pred_fallthru
        _
    $region6: #{tpu_custom_call.1} parent=1 // loop_footer
      %s23 = sadd.s32 1, %s19
    $region7: #{tpu_custom_call.1} parent=1 // loop_footer_branch
      %18 = sbr.rel target = $region3
    $region8: #{tpu_custom_call.1} parent=1 // loop_exit
      _
    %478 = vsyncpa [#allocation3], 1
    %s479 = scalar_lea.sflag [#allocation3], 1
    %480 = vsyncpa %s479, 1
    %481 = vsyncpa [#allocation6], 1
    %s482 = scalar_lea.sflag [#allocation6], 1
    %483 = vsyncpa %s482, 1
    %484 = vsyncpa [#allocation4], 1
    %s485 = scalar_lea.sflag [#allocation4], 1
    %486 = vsyncpa %s485, 1

</llo_original>
